<compile_context>
chip_gen: v7x
topology: tpu7x:2x2x1
jax: 0.10.0
libtpu: 0.0.40
codegen_flags: <defaults>
</compile_context>

<pallas_src>
import functools

import jax
import jax.numpy as jnp
from jax.experimental import pallas as pl
from jax.experimental.pallas import tpu as pltpu


_SQRT_2_OVER_PI = 0.7978845608028654
_INV_SQRT2 = 0.7071067811865476
_VMEM_LIMIT_BYTES = 32 * 1024 * 1024          # raised scoped-VMEM cap (helps v5e)
_VMEM_BUDGET_BYTES = 12 * 1024 * 1024         # per-step working-set target
_TARGET_LANES = 32768                         # review: sweep 16K-64K; use 32K


# --------------------------------------------------------------------------- #
# Activations (computed in f32 inside the kernel)
# --------------------------------------------------------------------------- #
def _gelu_tanh(x):
    # torch.nn.GELU(approximate='tanh').  tanh runs on the EUP slot, so the
    # per-element VALU cost is ~7 ops instead of ~18-20 for the erf polynomial.
    inner = _SQRT_2_OVER_PI * (x + 0.044715 * (x * x * x))
    return 0.5 * x * (1.0 + jnp.tanh(inner))


def _gelu_erf(x):
    # torch.nn.GELU() (exact, erf-based) with erf from Abramowitz & Stegun
    # 7.1.26 (|err| <= 1.5e-7).  Strict-parity fallback (VALU-heavier).
    a1, a2, a3, a4, a5 = (0.254829592, -0.284496736, 1.421413741,
                          -1.453152027, 1.061405429)
    p = 0.3275911
    z = jnp.abs(x) * _INV_SQRT2
    t = 1.0 / (1.0 + p * z)
    poly = t * (a1 + t * (a2 + t * (a3 + t * (a4 + t * a5))))
    erf = 1.0 - poly * jnp.exp(-(z * z))
    erf = jnp.where(x < 0, -erf, erf)
    return 0.5 * x * (1.0 + erf)


_ACTIVATIONS = {"tanh": _gelu_tanh, "erf": _gelu_erf}


# --------------------------------------------------------------------------- #
# Kernels
# --------------------------------------------------------------------------- #
def _mixer_kernel_lanes(x_ref, w1_ref, b1_ref, w2_ref, b2_ref, o_ref, *, act):
    # x_ref : (C, TL)    lane tile of flattened B*A*Q "pixels" (C = c_in*s)
    # w1_ref: (HB, C)    folded layer-1 weight      b1_ref: (HB, 1)  f32
    # w2_ref: (OB, HB)   folded layer-2 weight      b2_ref: (OB, 1)  f32
    # o_ref : (OB, TL)   output channels already in i*c_out+k order
    h = jnp.dot(w1_ref[...], x_ref[...],
                preferred_element_type=jnp.float32) + b1_ref[...]
    h = act(h)
    o = jnp.dot(w2_ref[...], h.astype(w2_ref.dtype),
                preferred_element_type=jnp.float32) + b2_ref[...]
    o_ref[...] = o.astype(o_ref.dtype)


def _mixer_kernel_rows(x_ref, w1_ref, b1_ref, w2_ref, b2_ref, o_ref, *,
                       act, r_tile):
    # x_ref : (r_tile, C, TQ)  block straight from the natural (B*A, C, Q)
    #                          layout (lane axis = Q, no wrapper transpose)
    # o_ref : (r_tile, OB, TQ)
    w1 = w1_ref[...]
    b1 = b1_ref[...]
    w2 = w2_ref[...]
    b2 = b2_ref[...]
    for r in range(r_tile):          # small static unroll; one MXU pair each
        h = jnp.dot(w1, x_ref[r], preferred_element_type=jnp.float32) + b1
        h = act(h)
        o = jnp.dot(w2, h.astype(w2.dtype),
                    preferred_element_type=jnp.float32) + b2
        o_ref[r] = o.astype(o_ref.dtype)


# --------------------------------------------------------------------------- #
# Weight folding: de-interleave + per-group selection moved into the weights
# --------------------------------------------------------------------------- #
def _fold_weights(w1, b1, w2, b2, *, s, c_out, shared):
    """Returns W1b (s*H1, c_in*s), b1b (s*H1,), W2b (s*c_out, s*H1), b2b.

    Group i, input feature j lives at natural channel j*s + i, so
      W1b[i*H1 + h, j*s + i] = w1[h, j]              (zeros elsewhere)
      shared    : W2b[i*c_out + k, i*H1 + h]  = w2[k, h]           (block diag)
      non-shared: W2b[i*c_out + k, i*H1 + m]  = w2[i*c_out + k, m] (row-sliced)
    Output channel i*c_out + k is exactly the PyTorch flatten(3) order.
    """
    H1, c_in = w1.shape
    eye = jnp.eye(s, dtype=w1.dtype)
    W1b = (w1[None, :, :, None] * eye[:, None, None, :]).reshape(s * H1,
                                                                 s * c_in)
    b1b = jnp.tile(b1, s)
    if shared:
        W2b = (eye[:, None, :, None] * w2[None, :, None, :]).reshape(
            s * c_out, s * H1)
        b2b = jnp.tile(b2, s)
    else:
        w2r = w2.reshape(s, c_out, H1)
        W2b = (w2r[:, :, None, :] * eye[:, None, :, None]).reshape(
            s * c_out, s * H1)
        b2b = b2
    return W1b, b1b, W2b, b2b


# --------------------------------------------------------------------------- #
# Tiling helpers
# --------------------------------------------------------------------------- #
def _largest_divisor_leq(n, cap):
    for d in range(max(1, min(n, cap)), 0, -1):
        if n % d == 0:
            return d
    return 1


# --------------------------------------------------------------------------- #
# Forward
# --------------------------------------------------------------------------- #
def mixers_forward(x, w1, b1, w2, b2, *, s, c_out, shared, gelu="tanh",
                   target_lanes=_TARGET_LANES,
                   vmem_budget_bytes=_VMEM_BUDGET_BYTES):
    """Pallas TPU forward of AMGCN `mixers`.

    x : (B, A, c_in*s, Q);  w1: (H1, c_in), b1: (H1,), w2: (O, H1), b2: (O,)
    with H1 = hidden (shared) or hidden*s, O = c_out (shared) or c_out*s.
    gelu: "tanh" (EUP-friendly, <=~1e-3 from nn.GELU()) or "erf" (<=~1e-6).
    """
    B, A, P, Q = x.shape
    c_in = w1.shape[1]
    assert P == c_in * s, (P, c_in, s)
    act = _ACTIVATIONS[gelu]

    W1b, b1b, W2b, b2b = _fold_weights(w1, b1, w2, b2, s=s, c_out=c_out,
                                       shared=shared)
    HB, C = W1b.shape
    OB = W2b.shape[0]
    b1k = b1b.reshape(HB, 1).astype(jnp.float32)
    b2k = b2b.reshape(OB, 1).astype(jnp.float32)

    itemsize = x.dtype.itemsize
    R = B * A
    M = R * Q
    wbytes = (W1b.size + W2b.size) * W1b.dtype.itemsize + (HB + OB) * 4
    cost = pl.CostEstimate(
        flops=int(2 * M * (HB * C + OB * HB)),
        transcendentals=int(M * HB),
        bytes_accessed=int(M * (C + OB) * itemsize + wbytes))

    # ------------------------------------------------------------------ #
    # Fast path: Q is lane-aligned -> run on the natural layout, zero
    # wrapper transposes on input and output.
    # ------------------------------------------------------------------ #
    if Q % 128 == 0:
        x3 = x.reshape(R, C, Q)                     # free reshape
        tq = 128
        for cand in range(min(Q, 2048), 127, -128):
            if Q % cand == 0:
                tq = cand
                break
        io_per_r = 2 * itemsize * (C + OB) * tq     # double-buffered in/out
        scratch = 4 * (2 * HB + OB) * tq            # f32 h / act temps / o
        r_cap = min(R, 16,
                    max(1, target_lanes // tq),
                    max(1, (vmem_budget_bytes - scratch) // max(io_per_r, 1)))
        r_tile = _largest_divisor_leq(R, max(1, r_cap))

        kernel = functools.partial(_mixer_kernel_rows, act=act, r_tile=r_tile)
        y3 = pl.pallas_call(
            kernel,
            out_shape=jax.ShapeDtypeStruct((R, OB, Q), x.dtype),
            grid_spec=pltpu.PrefetchScalarGridSpec(
                num_scalar_prefetch=0,
                grid=(R // r_tile, Q // tq),
                in_specs=[
                    pl.BlockSpec((r_tile, C, tq), lambda r, q: (r, 0, q)),
                    pl.BlockSpec((HB, C), lambda r, q: (0, 0)),
                    pl.BlockSpec((HB, 1), lambda r, q: (0, 0)),
                    pl.BlockSpec((OB, HB), lambda r, q: (0, 0)),
                    pl.BlockSpec((OB, 1), lambda r, q: (0, 0)),
                ],
                out_specs=pl.BlockSpec((r_tile, OB, tq),
                                       lambda r, q: (r, 0, q)),
            ),
            compiler_params=pltpu.CompilerParams(
                dimension_semantics=("parallel", "parallel"),
                vmem_limit_bytes=_VMEM_LIMIT_BYTES),
            cost_estimate=cost,
        )(x3, W1b, b1k, W2b, b2k)
        return y3.reshape(B, A, OB, Q)              # free reshape

    # ------------------------------------------------------------------ #
    # Fallback (Q far below 128): flatten to one big lane axis M = B*A*Q.
    # One transpose each way; big lane tiles sized to the VMEM budget.
    # ------------------------------------------------------------------ #
    xk = jnp.transpose(x, (2, 0, 1, 3)).reshape(C, M)
    per_lane = 2 * itemsize * (C + OB) + 4 * (2 * HB + OB)
    tl = min(target_lanes, max(512, vmem_budget_bytes // per_lane))
    tl = max(128, (tl // 128) * 128)
    if M <= tl:
        tl = M                       # single block == full dim (always legal)

    kernel = functools.partial(_mixer_kernel_lanes, act=act)
    yk = pl.pallas_call(
        kernel,
        out_shape=jax.ShapeDtypeStruct((OB, M), x.dtype),
        grid_spec=pltpu.PrefetchScalarGridSpec(
            num_scalar_prefetch=0,
            grid=(pl.cdiv(M, tl),),
            in_specs=[
                pl.BlockSpec((C, tl), lambda l: (0, l)),
                pl.BlockSpec((HB, C), lambda l: (0, 0)),
                pl.BlockSpec((HB, 1), lambda l: (0, 0)),
                pl.BlockSpec((OB, HB), lambda l: (0, 0)),
                pl.BlockSpec((OB, 1), lambda l: (0, 0)),
            ],
            out_specs=pl.BlockSpec((OB, tl), lambda l: (0, l)),
        ),
        compiler_params=pltpu.CompilerParams(
            dimension_semantics=("parallel",),
            vmem_limit_bytes=_VMEM_LIMIT_BYTES),
        cost_estimate=cost,
    )(xk, W1b, b1k, W2b, b2k)
    # (OB, M) -> (B, A, s*c_out, Q); channels already in i*c_out + k order.
    return jnp.transpose(yk.reshape(OB, B, A, Q), (1, 2, 0, 3))


# --------------------------------------------------------------------------- #
# Pure-JAX reference (replica of the PyTorch forward)
# --------------------------------------------------------------------------- #
def mixers_reference(x, w1, b1, w2, b2, *, s, c_out, shared,
                     approximate=False):
    B, A, P, Q = x.shape
    xp = jnp.transpose(x, (0, 1, 3, 2))                        # (B,A,Q,P)
    xg = jnp.stack([xp[..., i::s] for i in range(s)], axis=3)  # (B,A,Q,s,c_in)
    h = jnp.einsum("baqsc,hc->baqsh", xg, w1, precision="highest") + b1
    h = jax.nn.gelu(h, approximate=approximate)
    y = jnp.einsum("baqsh,oh->baqso", h, w2, precision="highest") + b2
    if not shared:
        y = jnp.stack([y[:, :, :, i, i * c_out:(i + 1) * c_out]
                       for i in range(s)], axis=3)
    y = y.reshape(B, A, Q, s * c_out)
    return jnp.transpose(y, (0, 1, 3, 2))                      # (B,A,s*c_out,Q)


def _init_linear(key, out_f, in_f):
    kw, kb = jax.random.split(key)
    bound = 1.0 / jnp.sqrt(in_f)
    w = jax.random.uniform(kw, (out_f, in_f), jnp.float32, -bound, bound)
    b = jax.random.uniform(kb, (out_f,), jnp.float32, -bound, bound)
    return w, b


if __name__ == "__main__":
    # mixers(kt, c_in, hidden, c_out, s, Shared_parameter); kt unused in fwd.
    B = 2
    c_in, hidden, c_out, s = 8, 32, 8, 2          # input channel dim = 16

    key = jax.random.PRNGKey(0)
    k1, k2, k3, k4, kx = jax.random.split(key, 5)
    w1s, b1s = _init_linear(k1, hidden, c_in)               # shared params
    w2s, b2s = _init_linear(k2, c_out, hidden)
    w1n, b1n = _init_linear(k3, hidden * s, c_in)            # non-shared params
    w2n, b2n = _init_linear(k4, c_out * s, hidden * s)

    # (name, A, Q, shared, gelu mode) -- Q=16 exercises the M-lane fallback,
    # Q=128 exercises the zero-transpose natural-layout path.
    cases = [
        ("shared    Q=16  tanh", 4, 16, True, "tanh"),
        ("nonshared Q=16  tanh", 4, 16, False, "tanh"),
        ("shared    Q=128 tanh", 3, 128, True, "tanh"),
        ("nonshared Q=128 tanh", 3, 128, False, "tanh"),
        ("shared    Q=16  erf ", 4, 16, True, "erf"),
    ]

    for idx, (name, A, Q, shared, gelu) in enumerate(cases):
        xkey = jax.random.fold_in(kx, idx)
        x = jax.random.normal(xkey, (B, A, c_in * s, Q), dtype=jnp.float32)
        if shared:
            w1, b1, w2, b2 = w1s, b1s, w2s, b2s
        else:
            w1, b1, w2, b2 = w1n, b1n, w2n, b2n

        out = mixers_forward(x, w1, b1, w2, b2, s=s, c_out=c_out,
                             shared=shared, gelu=gelu)
        out = jax.block_until_ready(out)
        assert out.shape == (B, A, s * c_out, Q), (name, out.shape)

        # Parity vs the exact (erf) GELU module forward.  The tanh-GELU mode
        # deviates by up to ~1e-3 (signed off per the perf review).
        ref_exact = mixers_reference(x, w1, b1, w2, b2, s=s, c_out=c_out,
                                     shared=shared, approximate=False)
        err_exact = float(jnp.max(jnp.abs(out - ref_exact)))
        tol_exact = 5e-3 if gelu == "tanh" else 2e-3
        assert err_exact <= tol_exact, (name, "vs exact GELU", err_exact)

        if gelu == "tanh":
            # Tight mechanical check against a tanh-GELU reference.
            ref_tanh = mixers_reference(x, w1, b1, w2, b2, s=s, c_out=c_out,
                                        shared=shared, approximate=True)
            err_tanh = float(jnp.max(jnp.abs(out - ref_tanh)))
            assert err_tanh <= 2e-3, (name, "vs tanh GELU", err_tanh)

    print("KERNEL_OK")
</pallas_src>

<mosaic_0001>
module attributes {stable_mosaic.version = 11 : i64} {
  func.func @_mixer_kernel_lanes(%arg0: i32, %arg1: memref<16x128xf32, #tpu.memory_space<vmem>>, %arg2: memref<64x16xf32, #tpu.memory_space<vmem>>, %arg3: memref<64x1xf32, #tpu.memory_space<vmem>>, %arg4: memref<16x64xf32, #tpu.memory_space<vmem>>, %arg5: memref<16x1xf32, #tpu.memory_space<vmem>>, %arg6: memref<16x128xf32, #tpu.memory_space<vmem>>) attributes {dimension_semantics = [#tpu.dimension_semantics<parallel>], iteration_bounds = array<i64: 1>, scalar_prefetch = 0 : i64, scratch_operands = 0 : i64, tpu.core_type = #tpu.core_type<tc>, window_params = [{transform_indices = @transform_0, window_bounds = array<i64: 16, 128>}, {pipeline_mode = #tpu.pipeline_mode<synchronous>, transform_indices = @transform_1, window_bounds = array<i64: 64, 16>}, {pipeline_mode = #tpu.pipeline_mode<synchronous>, transform_indices = @transform_2, window_bounds = array<i64: 64, 1>}, {pipeline_mode = #tpu.pipeline_mode<synchronous>, transform_indices = @transform_3, window_bounds = array<i64: 16, 64>}, {pipeline_mode = #tpu.pipeline_mode<synchronous>, transform_indices = @transform_4, window_bounds = array<i64: 16, 1>}, {transform_indices = @transform_5, window_bounds = array<i64: 16, 128>}]} {
    %c0 = arith.constant 0 : index
    %c0_0 = arith.constant 0 : index
    %0 = vector.load %arg2[%c0, %c0_0] : memref<64x16xf32, #tpu.memory_space<vmem>>, vector<64x16xf32>
    %c0_1 = arith.constant 0 : index
    %c0_2 = arith.constant 0 : index
    %1 = vector.load %arg1[%c0_1, %c0_2] : memref<16x128xf32, #tpu.memory_space<vmem>>, vector<16x128xf32>
    %cst = arith.constant dense<0.000000e+00> : vector<64x128xf32>
    %2 = tpu.matmul %0, %1, %cst {dimension_numbers = #tpu.dot_dimension_numbers<[1], [0], [0], [1], [0, 0, 1, 1], [], []>} : vector<64x16xf32>, vector<16x128xf32>, vector<64x128xf32> -> vector<64x128xf32>
    %c0_3 = arith.constant 0 : index
    %c0_4 = arith.constant 0 : index
    %3 = vector.load %arg3[%c0_3, %c0_4] : memref<64x1xf32, #tpu.memory_space<vmem>>, vector<64x1xf32>
    %4 = vector.broadcast %3 : vector<64x1xf32> to vector<64x128xf32>
    %5 = arith.addf %2, %4 : vector<64x128xf32>
    %6 = arith.mulf %5, %5 : vector<64x128xf32>
    %7 = arith.mulf %6, %5 : vector<64x128xf32>
    %cst_5 = arith.constant 4.471500e-02 : f32
    %8 = vector.broadcast %cst_5 : f32 to vector<64x128xf32>
    %9 = arith.mulf %8, %7 : vector<64x128xf32>
    %10 = arith.addf %5, %9 : vector<64x128xf32>
    %cst_6 = arith.constant 0.797884583 : f32
    %11 = vector.broadcast %cst_6 : f32 to vector<64x128xf32>
    %12 = arith.mulf %11, %10 : vector<64x128xf32>
    %cst_7 = arith.constant 5.000000e-01 : f32
    %13 = vector.broadcast %cst_7 : f32 to vector<64x128xf32>
    %14 = arith.mulf %13, %5 : vector<64x128xf32>
    %15 = math.tanh %12 : vector<64x128xf32>
    %cst_8 = arith.constant 1.000000e+00 : f32
    %16 = vector.broadcast %cst_8 : f32 to vector<64x128xf32>
    %17 = arith.addf %16, %15 : vector<64x128xf32>
    %18 = arith.mulf %14, %17 : vector<64x128xf32>
    %c0_9 = arith.constant 0 : index
    %c0_10 = arith.constant 0 : index
    %19 = vector.load %arg4[%c0_9, %c0_10] : memref<16x64xf32, #tpu.memory_space<vmem>>, vector<16x64xf32>
    %cst_11 = arith.constant dense<0.000000e+00> : vector<16x128xf32>
    %20 = tpu.matmul %19, %18, %cst_11 {dimension_numbers = #tpu.dot_dimension_numbers<[1], [0], [0], [1], [0, 0, 1, 1], [], []>} : vector<16x64xf32>, vector<64x128xf32>, vector<16x128xf32> -> vector<16x128xf32>
    %c0_12 = arith.constant 0 : index
    %c0_13 = arith.constant 0 : index
    %21 = vector.load %arg5[%c0_12, %c0_13] : memref<16x1xf32, #tpu.memory_space<vmem>>, vector<16x1xf32>
    %22 = vector.broadcast %21 : vector<16x1xf32> to vector<16x128xf32>
    %23 = arith.addf %20, %22 : vector<16x128xf32>
    %c0_14 = arith.constant 0 : index
    %c0_15 = arith.constant 0 : index
    %24 = vector.load %arg6[%c0_14, %c0_15] : memref<16x128xf32, #tpu.memory_space<vmem>>, vector<16x128xf32>
    tpu.vector_store %arg6[%c0_14, %c0_15], %23 {strides = array<i32>} : memref<16x128xf32, #tpu.memory_space<vmem>>, vector<16x128xf32>,
    return
  }
  func.func @transform_0(%arg0: i32) -> (i32, i32) {
    %c0_i32 = arith.constant 0 : i32
    %c0_i32_0 = arith.constant 0 : i32
    return %c0_i32, %arg0 : i32, i32
  }
  func.func @transform_1(%arg0: i32) -> (i32, i32) {
    %c0_i32 = arith.constant 0 : i32
    %c0_i32_0 = arith.constant 0 : i32
    %c0_i32_1 = arith.constant 0 : i32
    return %c0_i32, %c0_i32_0 : i32, i32
  }
  func.func @transform_2(%arg0: i32) -> (i32, i32) {
    %c0_i32 = arith.constant 0 : i32
    %c0_i32_0 = arith.constant 0 : i32
    %c0_i32_1 = arith.constant 0 : i32
    return %c0_i32, %c0_i32_0 : i32, i32
  }
  func.func @transform_3(%arg0: i32) -> (i32, i32) {
    %c0_i32 = arith.constant 0 : i32
    %c0_i32_0 = arith.constant 0 : i32
    %c0_i32_1 = arith.constant 0 : i32
    return %c0_i32, %c0_i32_0 : i32, i32
  }
  func.func @transform_4(%arg0: i32) -> (i32, i32) {
    %c0_i32 = arith.constant 0 : i32
    %c0_i32_0 = arith.constant 0 : i32
    %c0_i32_1 = arith.constant 0 : i32
    return %c0_i32, %c0_i32_0 : i32, i32
  }
  func.func @transform_5(%arg0: i32) -> (i32, i32) {
    %c0_i32 = arith.constant 0 : i32
    %c0_i32_0 = arith.constant 0 : i32
    return %c0_i32, %arg0 : i32, i32
  }
}

</mosaic_0001>

<llo_original>
// kernel: tpu_custom_call.1
$region0: #{tpu_custom_call.1}
  #allocation0 [shape = 'u32[]', space=smem, size = 0x4, offset = 0x4, fixed_abs, tag = 'smem constant byte address 0x4 - core index']
  #allocation1 [shape = 'u32[144,128]{1,0:T(1,128)}', space=vmem, size = 0x12000, scoped, tag = 'internal scratch']
  %s0 = inlined_call_operand.vmem [shape: f32[16,128], index: 0, kind: input, shape index: {}]
  %s1 = inlined_call_operand.vmem [shape: f32[64,16], index: 1, kind: input, shape index: {}]
  %s2 = inlined_call_operand.vmem [shape: f32[64,1], index: 2, kind: input, shape index: {}]
  %s3 = inlined_call_operand.vmem [shape: f32[16,64], index: 3, kind: input, shape index: {}]
  %s4 = inlined_call_operand.vmem [shape: f32[16,1], index: 4, kind: input, shape index: {}]
  %s5 = inlined_call_operand.hbm [shape: f32[16,128], index: 5, kind: output, shape index: {}]
  %s6 = sld [smem:[#allocation0]]
  $region30: #{tpu_custom_call.1} parent=0
    _
  %s8 = ssub.s32 1, %s6
  %s9 = scalar_select 0, %s8, %s6
  $region1: #{tpu_custom_call.1} parent=0
    #allocation2 [shape = 'u8[8192]{0}', space=vmem, size = 0x2000, scoped, tag = 'output window, operand 0, single buffered']
    #allocation3 [shape = 's32[1]{0}', space=sflag, size = 0x4, scoped, tag = 'scoped memory for tpu_custom_call.1']
    %10 = vsyncpa [#allocation3], 0
    // Predicated region
    $region2: #{tpu_custom_call.1} parent=1 // pred_check
      _
    $region3: #{tpu_custom_call.1} parent=1 // pred_check_branch
      %12 = sbr.rel (0) target = $region5
    $region4: #{tpu_custom_call.1} parent=1 // pred_region
      _
    $region5: #{tpu_custom_call.1} parent=1 // pred_fallthru
      _
    // Predicated region
    $region6: #{tpu_custom_call.1} parent=1 // pred_check
      _
    $region7: #{tpu_custom_call.1} parent=1 // pred_check_branch
      %14 = sbr.rel (0) target = $region9
    $region8: #{tpu_custom_call.1} parent=1 // pred_region
      _
    $region9: #{tpu_custom_call.1} parent=1 // pred_fallthru
      _
    // Predicated region
    $region10: #{tpu_custom_call.1} parent=1 // pred_check
      _
    $region11: #{tpu_custom_call.1} parent=1 // pred_check_branch
      %16 = sbr.rel (0) target = $region13
    $region12: #{tpu_custom_call.1} parent=1 // pred_region
      _
    $region13: #{tpu_custom_call.1} parent=1 // pred_fallthru
      _
    // Predicated region
    $region14: #{tpu_custom_call.1} parent=1 // pred_check
      _
    $region15: #{tpu_custom_call.1} parent=1 // pred_check_branch
      %18 = sbr.rel (0) target = $region17
    $region16: #{tpu_custom_call.1} parent=1 // pred_region
      _
    $region17: #{tpu_custom_call.1} parent=1 // pred_fallthru
      _
    // Predicated region
    $region18: #{tpu_custom_call.1} parent=1 // pred_check
      _
    $region19: #{tpu_custom_call.1} parent=1 // pred_check_branch
      %20 = sbr.rel (0) target = $region21
    $region20: #{tpu_custom_call.1} parent=1 // pred_region
      _
    $region21: #{tpu_custom_call.1} parent=1 // pred_fallthru
      _
    %v21 = vld [vmem:[%s1] sm:$0xff]
    %v22 = vld [vmem:[%s1 + $0x8] sm:$0xff]
    %v23 = vld [vmem:[%s1 + $0x10] sm:$0xff]
    %v24 = vld [vmem:[%s1 + $0x18] sm:$0xff]
    %v25 = vld [vmem:[%s1 + $0x20] sm:$0xff]
    %v26 = vld [vmem:[%s1 + $0x28] sm:$0xff]
    %v27 = vld [vmem:[%s1 + $0x30] sm:$0xff]
    %v28 = vld [vmem:[%s1 + $0x38] sm:$0xff]
    %v29 = vld [vmem:[%s0] sm:$0xff]
    %v30 = vld [vmem:[%s0 + $0x8] sm:$0xff]
    %v31 = vld [vmem:[%s2] sm:$0xff]
    %v32 = vld [vmem:[%s2 + $0x8] sm:$0xff]
    %v33 = vld [vmem:[%s2 + $0x10] sm:$0xff]
    %v34 = vld [vmem:[%s2 + $0x18] sm:$0xff]
    %v35 = vld [vmem:[%s2 + $0x20] sm:$0xff]
    %v36 = vld [vmem:[%s2 + $0x28] sm:$0xff]
    %v37 = vld [vmem:[%s2 + $0x30] sm:$0xff]
    %v38 = vld [vmem:[%s2 + $0x38] sm:$0xff]
    %40 = vset.pattern.permute.xlu0 0
    %41 = vperm.xlu0 %40, %v31
    %v42 = vpop.permute.xlu0 %41
    %45 = vset.pattern.permute.xlu0 0
    %46 = vperm.xlu0 %45, %v32
    %v47 = vpop.permute.xlu0 %46
    %50 = vset.pattern.permute.xlu0 0
    %51 = vperm.xlu0 %50, %v33
    %v52 = vpop.permute.xlu0 %51
    %55 = vset.pattern.permute.xlu0 0
    %56 = vperm.xlu0 %55, %v34
    %v57 = vpop.permute.xlu0 %56
    %60 = vset.pattern.permute.xlu0 0
    %61 = vperm.xlu0 %60, %v35
    %v62 = vpop.permute.xlu0 %61
    %65 = vset.pattern.permute.xlu0 0
    %66 = vperm.xlu0 %65, %v36
    %v67 = vpop.permute.xlu0 %66
    %70 = vset.pattern.permute.xlu0 0
    %71 = vperm.xlu0 %70, %v37
    %v72 = vpop.permute.xlu0 %71
    %75 = vset.pattern.permute.xlu0 0
    %76 = vperm.xlu0 %75, %v38
    %v77 = vpop.permute.xlu0 %76
    %vm79 = vcmask 130048
    %v81 = vsel %vm79, %v21, 0
    %v84 = vsel %vm79, %v22, 0
    %v87 = vsel %vm79, %v23, 0
    %v90 = vsel %vm79, %v24, 0
    %v93 = vsel %vm79, %v25, 0
    %v96 = vsel %vm79, %v26, 0
    %v99 = vsel %vm79, %v27, 0
    %v102 = vsel %vm79, %v28, 0
    %104 = vmatprep.subr.mxu0 0.0
    %105 = vmatpush1.msra.mxu0 %v29
    %106 = vmatprep.subr.mxu0 0.0
    %107 = vmatpush1.msra.mxu0 %v30
    %108 = vmatprep.subr.mxu0 0.0
    %109 = vmatpush1.msra.mxu0 0.0
    %110 = vmatprep.subr.mxu0 0.0
    %111 = vmatpush1.msra.mxu0 0.0
    %112 = vmatprep.subr.mxu0 0.0
    %113 = vmatpush1.msra.mxu0 0.0
    %114 = vmatprep.subr.mxu0 0.0
    %115 = vmatpush1.msra.mxu0 0.0
    %116 = vmatprep.subr.mxu0 0.0
    %117 = vmatpush1.msra.mxu0 0.0
    %118 = vmatprep.subr.mxu0 0.0
    %119 = vmatpush1.msra.mxu0 0.0
    %120 = vmatprep.subr.mxu0 0.0
    %121 = vmatpush1.msra.mxu0 0.0
    %122 = vmatprep.subr.mxu0 0.0
    %123 = vmatpush1.msra.mxu0 0.0
    %124 = vmatprep.subr.mxu0 0.0
    %125 = vmatpush1.msra.mxu0 0.0
    %126 = vmatprep.subr.mxu0 0.0
    %127 = vmatpush1.msra.mxu0 0.0
    %128 = vmatprep.subr.mxu0 0.0
    %129 = vmatpush1.msra.mxu0 0.0
    %130 = vmatprep.subr.mxu0 0.0
    %131 = vmatpush1.msra.mxu0 0.0
    %132 = vmatprep.subr.mxu0 0.0
    %133 = vmatpush1.msra.mxu0 0.0
    %134 = vmatprep.subr.mxu0 0.0
    %135 = vmatpush1.msra.mxu0 0.0
    %136 = vmatprep.subr.mxu0 0.0
    %137 = vmatpush1.msra.mxu0 0.0
    %138 = vmatprep.subr.mxu0 0.0
    %139 = vmatpush1.msra.mxu0 0.0
    %140 = vmatprep.subr.mxu0 0.0
    %141 = vmatpush1.msra.mxu0 0.0
    %142 = vmatprep.subr.mxu0 0.0
    %143 = vmatpush1.msra.mxu0 0.0
    %144 = vmatprep.subr.mxu0 0.0
    %145 = vmatpush1.msra.mxu0 0.0
    %146 = vmatprep.subr.mxu0 0.0
    %147 = vmatpush1.msra.mxu0 0.0
    %148 = vmatprep.subr.mxu0 0.0
    %149 = vmatpush1.msra.mxu0 0.0
    %150 = vmatprep.subr.mxu0 0.0
    %151 = vmatpush1.msra.mxu0 0.0
    %152 = vmatprep.subr.mxu0 0.0
    %153 = vmatpush1.msra.mxu0 0.0
    %154 = vmatprep.subr.mxu0 0.0
    %155 = vmatpush1.msra.mxu0 0.0
    %156 = vmatprep.subr.mxu0 0.0
    %157 = vmatpush1.msra.mxu0 0.0
    %158 = vmatprep.subr.mxu0 0.0
    %159 = vmatpush1.msra.mxu0 0.0
    %160 = vmatprep.subr.mxu0 0.0
    %161 = vmatpush1.msra.mxu0 0.0
    %162 = vmatprep.subr.mxu0 0.0
    %163 = vmatpush1.msra.mxu0 0.0
    %164 = vmatprep.subr.mxu0 0.0
    %165 = vmatpush1.msra.mxu0 0.0
    %166 = vmatprep.subr.mxu0 0.0
    %167 = vmatpush1.msra.mxu0 0.0
    %168 = vmatprep.mubr.f32.mxu0 0.0
    %169 = vmatmul.mubr.f32.gmra.mrb[0].mxu0 %v81
    %v170 = vpop.f32.mrb[0].mxu0
    %v171 = vadd.f32 %v42, %v170
    %v172 = vpop.f32.mrb[0].mxu0
    %173 = vmatprep.mubr.f32.mxu0 0.0
    %174 = vmatmul.mubr.f32.gmra.mrb[0].mxu0 %v84
    %v175 = vpop.f32.mrb[0].mxu0
    %v176 = vadd.f32 %v47, %v175
    %v177 = vpop.f32.mrb[0].mxu0
    %178 = vmatprep.mubr.f32.mxu0 0.0
    %179 = vmatmul.mubr.f32.gmra.mrb[0].mxu0 %v87
    %v180 = vpop.f32.mrb[0].mxu0
    %v181 = vadd.f32 %v52, %v180
    %v182 = vpop.f32.mrb[0].mxu0
    %183 = vmatprep.mubr.f32.mxu0 0.0
    %184 = vmatmul.mubr.f32.gmra.mrb[0].mxu0 %v90
    %v185 = vpop.f32.mrb[0].mxu0
    %v186 = vadd.f32 %v57, %v185
    %v187 = vpop.f32.mrb[0].mxu0
    %188 = vmatprep.mubr.f32.mxu0 0.0
    %189 = vmatmul.mubr.f32.gmra.mrb[0].mxu0 %v93
    %v190 = vpop.f32.mrb[0].mxu0
    %v191 = vadd.f32 %v62, %v190
    %v192 = vpop.f32.mrb[0].mxu0
    %193 = vmatprep.mubr.f32.mxu0 0.0
    %194 = vmatmul.mubr.f32.gmra.mrb[0].mxu0 %v96
    %v195 = vpop.f32.mrb[0].mxu0
    %v196 = vadd.f32 %v67, %v195
    %v197 = vpop.f32.mrb[0].mxu0
    %198 = vmatprep.mubr.f32.mxu0 0.0
    %199 = vmatmul.mubr.f32.gmra.mrb[0].mxu0 %v99
    %v200 = vpop.f32.mrb[0].mxu0
    %v201 = vadd.f32 %v72, %v200
    %v202 = vpop.f32.mrb[0].mxu0
    %203 = vmatprep.mubr.f32.mxu0 0.0
    %204 = vmatmul.mubr.f32.gmra.mrb[0].mxu0 %v102
    %v205 = vpop.f32.mrb[0].mxu0
    %v206 = vadd.f32 %v77, %v205
    %v207 = vpop.f32.mrb[0].mxu0
    %208 = vdwg.mxu0
    %v209 = vmul.f32 %v171, %v171
    %v210 = vmul.f32 %v176, %v176
    %v211 = vmul.f32 %v181, %v181
    %v212 = vmul.f32 %v186, %v186
    %v213 = vmul.f32 %v191, %v191
    %v214 = vmul.f32 %v196, %v196
    %v215 = vmul.f32 %v201, %v201
    %v216 = vmul.f32 %v206, %v206
    %v217 = vmul.f32 %v209, %v171
    %v218 = vmul.f32 %v210, %v176
    %v219 = vmul.f32 %v211, %v181
    %v220 = vmul.f32 %v212, %v186
    %v221 = vmul.f32 %v213, %v191
    %v222 = vmul.f32 %v214, %v196
    %v223 = vmul.f32 %v215, %v201
    %v224 = vmul.f32 %v216, %v206
    %v225 = vmul.f32 %v217, 0.044715
    %v226 = vmul.f32 %v218, 0.044715
    %v227 = vmul.f32 %v219, 0.044715
    %v228 = vmul.f32 %v220, 0.044715
    %v229 = vmul.f32 %v221, 0.044715
    %v230 = vmul.f32 %v222, 0.044715
    %v231 = vmul.f32 %v223, 0.044715
    %v232 = vmul.f32 %v224, 0.044715
    %v233 = vadd.f32 %v171, %v225
    %v234 = vadd.f32 %v176, %v226
    %v235 = vadd.f32 %v181, %v227
    %v236 = vadd.f32 %v186, %v228
    %v237 = vadd.f32 %v191, %v229
    %v238 = vadd.f32 %v196, %v230
    %v239 = vadd.f32 %v201, %v231
    %v240 = vadd.f32 %v206, %v232
    %v241 = vmul.f32 %v233, 0.7978846
    %v242 = vmul.f32 %v234, 0.7978846
    %v243 = vmul.f32 %v235, 0.7978846
    %v244 = vmul.f32 %v236, 0.7978846
    %v245 = vmul.f32 %v237, 0.7978846
    %v246 = vmul.f32 %v238, 0.7978846
    %v247 = vmul.f32 %v239, 0.7978846
    %v248 = vmul.f32 %v240, 0.7978846
    %v249 = vmul.f32 %v171, 0.5
    %v250 = vmul.f32 %v176, 0.5
    %v251 = vmul.f32 %v181, 0.5
    %v252 = vmul.f32 %v186, 0.5
    %v253 = vmul.f32 %v191, 0.5
    %v254 = vmul.f32 %v196, 0.5
    %v255 = vmul.f32 %v201, 0.5
    %v256 = vmul.f32 %v206, 0.5
    %v257 = vtanh.pop %v241
    %v258 = vtanh.pop %v242
    %v259 = vtanh.pop %v243
    %v260 = vtanh.pop %v244
    %v261 = vtanh.pop %v245
    %v262 = vtanh.pop %v246
    %v263 = vtanh.pop %v247
    %v264 = vtanh.pop %v248
    %v265 = vadd.f32 %v257, 1.0
    %v266 = vadd.f32 %v258, 1.0
    %v267 = vadd.f32 %v259, 1.0
    %v268 = vadd.f32 %v260, 1.0
    %v269 = vadd.f32 %v261, 1.0
    %v270 = vadd.f32 %v262, 1.0
    %v271 = vadd.f32 %v263, 1.0
    %v272 = vadd.f32 %v264, 1.0
    %v273 = vmul.f32 %v249, %v265
    %v274 = vmul.f32 %v250, %v266
    %v275 = vmul.f32 %v251, %v267
    %v276 = vmul.f32 %v252, %v268
    %v277 = vmul.f32 %v253, %v269
    %v278 = vmul.f32 %v254, %v270
    %v279 = vmul.f32 %v255, %v271
    %v280 = vmul.f32 %v256, %v272
    %v281 = vld [vmem:[%s3] sm:$0xff]
    %v282 = vld [vmem:[%s3 + $0x8] sm:$0xff]
    %v283 = vld [vmem:[%s4] sm:$0xff]
    %v284 = vld [vmem:[%s4 + $0x8] sm:$0xff]
    %286 = vset.pattern.permute.xlu0 0
    %287 = vperm.xlu0 %286, %v283
    %v288 = vpop.permute.xlu0 %287
    %291 = vset.pattern.permute.xlu0 0
    %292 = vperm.xlu0 %291, %v284
    %v293 = vpop.permute.xlu0 %292
    %vm295 = vcmask 523264
    %v297 = vsel %vm295, %v281, 0
    %v300 = vsel %vm295, %v282, 0
    %302 = vmatprep.subr.mxu0 0.0
    %303 = vmatpush1.msra.mxu0 %v273
    %304 = vmatprep.subr.mxu0 0.0
    %305 = vmatpush1.msra.mxu0 %v274
    %306 = vmatprep.subr.mxu0 0.0
    %307 = vmatpush1.msra.mxu0 %v275
    %308 = vmatprep.subr.mxu0 0.0
    %309 = vmatpush1.msra.mxu0 %v276
    %310 = vmatprep.subr.mxu0 0.0
    %311 = vmatpush1.msra.mxu0 %v277
    %312 = vmatprep.subr.mxu0 0.0
    %313 = vmatpush1.msra.mxu0 %v278
    %314 = vmatprep.subr.mxu0 0.0
    %315 = vmatpush1.msra.mxu0 %v279
    %316 = vmatprep.subr.mxu0 0.0
    %317 = vmatpush1.msra.mxu0 %v280
    %318 = vmatprep.subr.mxu0 0.0
    %319 = vmatpush1.msra.mxu0 0.0
    %320 = vmatprep.subr.mxu0 0.0
    %321 = vmatpush1.msra.mxu0 0.0
    %322 = vmatprep.subr.mxu0 0.0
    %323 = vmatpush1.msra.mxu0 0.0
    %324 = vmatprep.subr.mxu0 0.0
    %325 = vmatpush1.msra.mxu0 0.0
    %326 = vmatprep.subr.mxu0 0.0
    %327 = vmatpush1.msra.mxu0 0.0
    %328 = vmatprep.subr.mxu0 0.0
    %329 = vmatpush1.msra.mxu0 0.0
    %330 = vmatprep.subr.mxu0 0.0
    %331 = vmatpush1.msra.mxu0 0.0
    %332 = vmatprep.subr.mxu0 0.0
    %333 = vmatpush1.msra.mxu0 0.0
    %334 = vmatprep.subr.mxu0 0.0
    %335 = vmatpush1.msra.mxu0 0.0
    %336 = vmatprep.subr.mxu0 0.0
    %337 = vmatpush1.msra.mxu0 0.0
    %338 = vmatprep.subr.mxu0 0.0
    %339 = vmatpush1.msra.mxu0 0.0
    %340 = vmatprep.subr.mxu0 0.0
    %341 = vmatpush1.msra.mxu0 0.0
    %342 = vmatprep.subr.mxu0 0.0
    %343 = vmatpush1.msra.mxu0 0.0
    %344 = vmatprep.subr.mxu0 0.0
    %345 = vmatpush1.msra.mxu0 0.0
    %346 = vmatprep.subr.mxu0 0.0
    %347 = vmatpush1.msra.mxu0 0.0
    %348 = vmatprep.subr.mxu0 0.0
    %349 = vmatpush1.msra.mxu0 0.0
    %350 = vmatprep.subr.mxu0 0.0
    %351 = vmatpush1.msra.mxu0 0.0
    %352 = vmatprep.subr.mxu0 0.0
    %353 = vmatpush1.msra.mxu0 0.0
    %354 = vmatprep.subr.mxu0 0.0
    %355 = vmatpush1.msra.mxu0 0.0
    %356 = vmatprep.subr.mxu0 0.0
    %357 = vmatpush1.msra.mxu0 0.0
    %358 = vmatprep.subr.mxu0 0.0
    %359 = vmatpush1.msra.mxu0 0.0
    %360 = vmatprep.subr.mxu0 0.0
    %361 = vmatpush1.msra.mxu0 0.0
    %362 = vmatprep.subr.mxu0 0.0
    %363 = vmatpush1.msra.mxu0 0.0
    %364 = vmatprep.subr.mxu0 0.0
    %365 = vmatpush1.msra.mxu0 0.0
    %366 = vmatprep.mubr.f32.mxu0 0.0
    %367 = vmatmul.mubr.f32.gmra.mrb[0].mxu0 %v297
    %v368 = vpop.f32.mrb[0].mxu0
    %v369 = vadd.f32 %v288, %v368
    %v370 = vpop.f32.mrb[0].mxu0
    %371 = vmatprep.mubr.f32.mxu0 0.0
    %372 = vmatmul.mubr.f32.gmra.mrb[0].mxu0 %v300
    %v373 = vpop.f32.mrb[0].mxu0
    %v374 = vadd.f32 %v293, %v373
    %v375 = vpop.f32.mrb[0].mxu0
    %376 = vdwg.mxu0
    %377 = vst [vmem:[#allocation2] sm:$0xff] %v369
    %378 = vst [vmem:[#allocation2 + $0x8] sm:$0xff] %v374
    // Predicated region
    $region22: #{tpu_custom_call.1} parent=1 // pred_check
      _
    $region23: #{tpu_custom_call.1} parent=1 // pred_check_branch
      %380 = sbr.rel (0) target = $region25
    $region24: #{tpu_custom_call.1} parent=1 // pred_region
      %s382 = ssub.s32 256, 256
      %383 = vsyncadd [#allocation3], %s382
      %s384 = sshll.u32 [#allocation2], 4
      %s385 = int_to_ptr.vmem [resolvable:$true] %s384
      %390 = dma.vmem_to_hbm [thread:$0]  %s385, 256, %s5, [#allocation3], 128, 128, 8
    $region25: #{tpu_custom_call.1} parent=1 // pred_fallthru
      _
    // Predicated region
    $region26: #{tpu_custom_call.1} parent=1 // pred_check
      _
    $region27: #{tpu_custom_call.1} parent=1 // pred_check_branch
      %392 = sbr.rel (0) target = $region29
    $region28: #{tpu_custom_call.1} parent=1 // pred_region
      %393 = dma.done [#allocation3], 256
    $region29: #{tpu_custom_call.1} parent=1 // pred_fallthru
      _
    %394 = vsyncpa [#allocation3], 1

</llo_original>
